<compile_context>
chip_gen: v7x
topology: tpu7x:2x2x1
jax: 0.10.0
libtpu: 0.0.40
codegen_flags: <defaults>
</compile_context>

<pallas_src>
import jax
import jax.numpy as jnp
from jax.experimental import pallas as pl
from jax.experimental.pallas import tpu as pltpu

LANE = 128
SUBLANE = 8


def _round_up(v, m):
    return ((v + m - 1) // m) * m


def _largest_aligned_divisor(dim, cap, align):
    """Largest multiple of `align` that divides `dim` and is <= cap.

    `dim` must itself be a multiple of `align`, so `align` always works.
    """
    t = min(cap, dim)
    t = (t // align) * align
    while t >= align:
        if dim % t == 0:
            return t
        t -= align
    return align


def _ensemble_kernel_f32(x_ref, w_ref, b_ref, o_ref):
    """f32 output: accumulate directly into the resident output block.

    Bias is folded into the k==0 init, so there is no finalize branch.
    """
    k = pl.program_id(2)

    @pl.when(k == 0)
    def _init():
        o_ref[...] = jnp.broadcast_to(b_ref[...], o_ref.shape)

    o_ref[...] += jnp.dot(
        x_ref[...], w_ref[...], preferred_element_type=jnp.float32
    )


def _ensemble_kernel_cast(x_ref, w_ref, b_ref, o_ref, acc_ref):
    """Non-f32 output: accumulate (bias-initialized) in f32 scratch, cast once."""
    k = pl.program_id(2)

    @pl.when(k == 0)
    def _init():
        acc_ref[...] = jnp.broadcast_to(b_ref[...], acc_ref.shape)

    acc_ref[...] += jnp.dot(
        x_ref[...], w_ref[...], preferred_element_type=jnp.float32
    )

    @pl.when(k == pl.num_programs(2) - 1)
    def _finalize():
        o_ref[...] = acc_ref[...].astype(o_ref.dtype)


def ensemble_forward(x, weights, biases, *, weight_dtype=None, pre_reduce=False,
                     tn_cap=512, tb_cap=256):
    """sum_m (x @ weights[m] + biases[m]) via a single-matmul Pallas kernel.

    x:       [B, D_in]
    weights: [M, D_in, D_out]
    biases:  [M, 1, D_out]
    returns: [B, D_out] (dtype of x)
    """
    B, D_in = x.shape
    M, _, D_out = weights.shape
    out_dtype = x.dtype

    if pre_reduce:
        # TODO(synk): when ensemble weights are static across calls, hoist this
        # sum outside jit once to cut the dominant weight HBM stream by M x.
        weights = jnp.sum(weights, axis=0, keepdims=True)
        biases = jnp.sum(biases, axis=0, keepdims=True)
        M = 1

    if weight_dtype is not None:
        # Stream weights/x narrow; accumulation stays f32 inside the kernel.
        weights = weights.astype(weight_dtype)
        x = x.astype(weight_dtype)

    x_bytes = jnp.dtype(x.dtype).itemsize
    w_bytes = jnp.dtype(weights.dtype).itemsize
    out_bytes = jnp.dtype(out_dtype).itemsize

    # --- VMEM budget (chip-aware). ---
    try:
        phys_vmem = int(pltpu.get_tpu_info().vmem_capacity_bytes)
    except Exception:
        phys_vmem = 64 << 20  # conservative (v7x-sized) fallback
    vmem_budget = phys_vmem // 2

    # --- N (lane) tiling: pad D_out to a lane multiple, lane-dense tiles,
    #     and leave >= 2 N tiles when possible so both v7x TCs get work. ---
    D_out_p = _round_up(D_out, LANE)
    tn_cap_eff = max(LANE, min(tn_cap, D_out_p))
    if D_out_p >= 2 * LANE:
        tn_cap_eff = min(tn_cap_eff, (D_out_p // 2) // LANE * LANE)
    tn = _largest_aligned_divisor(D_out_p, tn_cap_eff, LANE)

    # --- B tiling (parallel axis; blocks stay sublane-aligned). ---
    if B <= tb_cap:
        tb, B_p = B, B
    else:
        tb = tb_cap                    # multiple of SUBLANE
        B_p = _round_up(B, tb)

    def _vmem_use(tk_):
        w_buf = 2 * tk_ * tn * w_bytes          # double-buffered weight tiles
        x_buf = 2 * tb * tk_ * x_bytes          # double-buffered x tile
        o_buf = 2 * tb * tn * out_bytes         # output block
        acc_buf = 0 if out_dtype == jnp.float32 else tb * tn * 4
        b_buf = 2 * tn * 4
        return w_buf + x_buf + o_buf + acc_buf + b_buf

    # --- K tiling: prefer the whole (padded) feature dim so the x block is
    #     DMA'd exactly once per batch tile; split only if VMEM-bound. ---
    D_in_p = _round_up(D_in, SUBLANE)
    tk = D_in_p
    if _vmem_use(tk) > vmem_budget and D_in_p > LANE:
        D_in_p = _round_up(D_in, LANE)
        tk = _largest_aligned_divisor(D_in_p, D_in_p, LANE)
        while tk > LANE and _vmem_use(tk) > vmem_budget:
            tk = _largest_aligned_divisor(D_in_p, tk - LANE, LANE)
    kx_blocks = D_in_p // tk
    K_p = M * D_in_p

    # --- Zero-pad to the tiled shapes (padded rows/cols contribute 0). ---
    if B_p != B or D_in_p != D_in:
        x = jnp.pad(x, ((0, B_p - B), (0, D_in_p - D_in)))
    if D_in_p != D_in or D_out_p != D_out:
        weights = jnp.pad(
            weights, ((0, 0), (0, D_in_p - D_in), (0, D_out_p - D_out)))
    w_flat = weights.reshape(K_p, D_out_p)        # K-concat slab (view)

    b_sum = jnp.sum(biases, axis=0).astype(jnp.float32)   # [1, D_out]
    if D_out_p != D_out:
        b_sum = jnp.pad(b_sum, ((0, 0), (0, D_out_p - D_out)))

    grid = (B_p // tb, D_out_p // tn, K_p // tk)
    n_btiles, n_ntiles = grid[0], grid[1]

    if kx_blocks == 1:
        x_index_map = lambda b, n, k: (b, 0)      # resident per batch tile
    else:
        x_index_map = lambda b, n, k: (b, k % kx_blocks)

    in_specs = [
        pl.BlockSpec((tb, tk), x_index_map),
        pl.BlockSpec((tk, tn), lambda b, n, k: (k, n)),   # weight slab stream
        pl.BlockSpec((1, tn), lambda b, n, k: (0, n)),    # pre-summed bias row
    ]
    # Output block constant along K -> resident accumulator.
    out_spec = pl.BlockSpec((tb, tn), lambda b, n, k: (b, n))

    if out_dtype == jnp.float32:
        kernel = _ensemble_kernel_f32
        scratch_shapes = []
    else:
        kernel = _ensemble_kernel_cast
        scratch_shapes = [pltpu.VMEM((tb, tn), jnp.float32)]

    # Cost estimate reflecting the actual DMA traffic of this layout.
    if kx_blocks == 1:
        x_traffic = B_p * D_in_p * x_bytes                      # once per b tile
    else:
        x_traffic = B_p * K_p * x_bytes * n_ntiles              # re-cycled per n
    cost = pl.CostEstimate(
        flops=2 * B_p * K_p * D_out_p,
        transcendentals=0,
        bytes_accessed=int(
            x_traffic
            + K_p * D_out_p * w_bytes * n_btiles
            + D_out_p * 4 * n_btiles
            + B_p * D_out_p * out_bytes
        ),
    )

    out = pl.pallas_call(
        kernel,
        out_shape=jax.ShapeDtypeStruct((B_p, D_out_p), out_dtype),
        grid_spec=pltpu.PrefetchScalarGridSpec(
            num_scalar_prefetch=0,
            grid=grid,
            in_specs=in_specs,
            out_specs=out_spec,
            scratch_shapes=scratch_shapes,
        ),
        compiler_params=pltpu.CompilerParams(
            # B and N tiles are independent (megacore splittable); K reduces.
            dimension_semantics=("parallel", "parallel", "arbitrary"),
            vmem_limit_bytes=int(vmem_budget),
        ),
        cost_estimate=cost,
    )(x, w_flat, b_sum)

    if B_p != B or D_out_p != D_out:
        out = out[:B, :D_out]
    return out


if __name__ == "__main__":
    key = jax.random.PRNGKey(0)
    k_x, k_w, k_b = jax.random.split(key, 3)

    num_models = 3          # ensemble size (len(models))
    # Deliberately non-aligned dims to exercise the padding / slicing paths.
    B, D_in, D_out = 8, 36, 200

    x = jax.random.normal(k_x, (B, D_in), dtype=jnp.float32)
    weights = jax.random.normal(
        k_w, (num_models, D_in, D_out), dtype=jnp.float32) * 0.1
    biases = jax.random.normal(
        k_b, (num_models, 1, D_out), dtype=jnp.float32) * 0.1

    y = jax.block_until_ready(ensemble_forward(x, weights, biases))

    # pure-JAX reference: sum over member models of (x @ W_m + b_m)
    y_ref = jnp.sum(jnp.einsum("bi,mio->mbo", x, weights) + biases, axis=0)

    assert y.shape == (B, D_out), y.shape
    assert jnp.allclose(y, y_ref, atol=1e-3, rtol=1e-3), "mismatch vs reference"

    print("KERNEL_OK")
</pallas_src>

<mosaic_0001>
module attributes {stable_mosaic.version = 11 : i64} {
  func.func @_ensemble_kernel_f32(%arg0: i32, %arg1: i32, %arg2: i32, %arg3: memref<8x40xf32, #tpu.memory_space<vmem>>, %arg4: memref<40x128xf32, #tpu.memory_space<vmem>>, %arg5: memref<1x128xf32, #tpu.memory_space<vmem>>, %arg6: memref<8x128xf32, #tpu.memory_space<vmem>>) attributes {dimension_semantics = [#tpu.dimension_semantics<parallel>, #tpu.dimension_semantics<parallel>, #tpu.dimension_semantics<arbitrary>], iteration_bounds = array<i64: 1, 2, 3>, scalar_prefetch = 0 : i64, scratch_operands = 0 : i64, tpu.core_type = #tpu.core_type<tc>, window_params = [{transform_indices = @transform_0, window_bounds = array<i64: 8, 40>}, {transform_indices = @transform_1, window_bounds = array<i64: 40, 128>}, {transform_indices = @transform_2, window_bounds = array<i64: 1, 128>}, {transform_indices = @transform_3, window_bounds = array<i64: 8, 128>}]} {
    %c0_i32 = arith.constant 0 : i32
    %0 = arith.cmpi eq, %arg2, %c0_i32 : i32
    %1 = arith.extui %0 : i1 to i32
    %c0_i32_0 = arith.constant 0 : i32
    %2 = arith.cmpi ne, %1, %c0_i32_0 : i32
    scf.if %2 {
      %c0_8 = arith.constant 0 : index
      %c0_9 = arith.constant 0 : index
      %9 = vector.load %arg5[%c0_8, %c0_9] : memref<1x128xf32, #tpu.memory_space<vmem>>, vector<1x128xf32>
      %10 = vector.shape_cast %9 : vector<1x128xf32> to vector<1x128xf32>
      %11 = vector.broadcast %10 : vector<1x128xf32> to vector<8x128xf32>
      %c0_10 = arith.constant 0 : index
      %c0_11 = arith.constant 0 : index
      %12 = vector.load %arg6[%c0_10, %c0_11] : memref<8x128xf32, #tpu.memory_space<vmem>>, vector<8x128xf32>
      tpu.vector_store %arg6[%c0_10, %c0_11], %11 {strides = array<i32>} : memref<8x128xf32, #tpu.memory_space<vmem>>, vector<8x128xf32>,
    } else {
    }
    %c0 = arith.constant 0 : index
    %c0_1 = arith.constant 0 : index
    %3 = vector.load %arg6[%c0, %c0_1] : memref<8x128xf32, #tpu.memory_space<vmem>>, vector<8x128xf32>
    %c0_2 = arith.constant 0 : index
    %c0_3 = arith.constant 0 : index
    %4 = vector.load %arg3[%c0_2, %c0_3] : memref<8x40xf32, #tpu.memory_space<vmem>>, vector<8x40xf32>
    %c0_4 = arith.constant 0 : index
    %c0_5 = arith.constant 0 : index
    %5 = vector.load %arg4[%c0_4, %c0_5] : memref<40x128xf32, #tpu.memory_space<vmem>>, vector<40x128xf32>
    %cst = arith.constant dense<0.000000e+00> : vector<8x128xf32>
    %6 = tpu.matmul %4, %5, %cst {dimension_numbers = #tpu.dot_dimension_numbers<[1], [0], [0], [1], [0, 0, 1, 1], [], []>} : vector<8x40xf32>, vector<40x128xf32>, vector<8x128xf32> -> vector<8x128xf32>
    %7 = arith.addf %3, %6 : vector<8x128xf32>
    %c0_6 = arith.constant 0 : index
    %c0_7 = arith.constant 0 : index
    %8 = vector.load %arg6[%c0_6, %c0_7] : memref<8x128xf32, #tpu.memory_space<vmem>>, vector<8x128xf32>
    tpu.vector_store %arg6[%c0_6, %c0_7], %7 {strides = array<i32>} : memref<8x128xf32, #tpu.memory_space<vmem>>, vector<8x128xf32>,
    return
  }
  func.func @transform_0(%arg0: i32, %arg1: i32, %arg2: i32) -> (i32, i32) {
    %c0_i32 = arith.constant 0 : i32
    %c0_i32_0 = arith.constant 0 : i32
    return %arg0, %c0_i32 : i32, i32
  }
  func.func @transform_1(%arg0: i32, %arg1: i32, %arg2: i32) -> (i32, i32) {
    %c0_i32 = arith.constant 0 : i32
    return %arg2, %arg1 : i32, i32
  }
  func.func @transform_2(%arg0: i32, %arg1: i32, %arg2: i32) -> (i32, i32) {
    %c0_i32 = arith.constant 0 : i32
    %c0_i32_0 = arith.constant 0 : i32
    return %c0_i32, %arg1 : i32, i32
  }
  func.func @transform_3(%arg0: i32, %arg1: i32, %arg2: i32) -> (i32, i32) {
    %c0_i32 = arith.constant 0 : i32
    return %arg0, %arg1 : i32, i32
  }
}

</mosaic_0001>

<llo_original>
// kernel: tpu_custom_call.1
$region0: #{tpu_custom_call.1}
  #allocation0 [shape = 'u32[]', space=smem, size = 0x4, offset = 0x4, fixed_abs, tag = 'smem constant byte address 0x4 - core index']
  #allocation1 [shape = 'u32[144,128]{1,0:T(1,128)}', space=vmem, size = 0x12000, scoped, tag = 'internal scratch']
  %s0 = inlined_call_operand.hbm [shape: f32[8,40], index: 0, kind: input, shape index: {}]
  %s1 = inlined_call_operand.hbm [shape: f32[120,256], index: 1, kind: input, shape index: {}]
  %s2 = inlined_call_operand.vmem [shape: f32[1,256], index: 2, kind: input, shape index: {}]
  %s3 = inlined_call_operand.hbm [shape: f32[8,256], index: 3, kind: output, shape index: {}]
  %s4 = sld [smem:[#allocation0]]
  $region57: #{tpu_custom_call.1} parent=0
    _
  %s6 = ssub.s32 1, %s4
  %s7 = scalar_select 0, %s6, %s4
  $region1: #{tpu_custom_call.1} parent=0
    #allocation2 [shape = 'u8[4096]{0}', space=vmem, size = 0x1000, scoped, tag = 'input window, operand 0, single buffered']
    #allocation3 [shape = 's32[2]{0}', space=sflag, size = 0x8, scoped, tag = 'scoped memory for tpu_custom_call.1']
    #allocation4 [shape = 's32[2]{0}', space=sflag, size = 0x8, scoped, tag = 'scoped memory for tpu_custom_call.1']
    #allocation5 [shape = 'u8[40960]{0}', space=vmem, size = 0xa000, scoped, tag = 'input window, operand 1']
    #allocation6 [shape = 's32[2]{0}', space=sflag, size = 0x8, scoped, tag = 'scoped memory for tpu_custom_call.1']
    #allocation7 [shape = 'u8[8192]{0}', space=vmem, size = 0x2000, scoped, tag = 'output window, operand 0']
    %8 = vsyncpa [#allocation3], 0
    %9 = vsyncpa [#allocation6], 0
    %s10 = scalar_lea.sflag [#allocation6], 1
    %11 = vsyncpa %s10, 0
    %12 = vsyncpa [#allocation4], 0
    %s13 = scalar_lea.sflag [#allocation4], 1
    %14 = vsyncpa %s13, 0
    loop: start=0, step=1, limit=8
    $region2: #{tpu_custom_call.1} parent=1 // loop_pre_header
      _
    $region3: #{tpu_custom_call.1} parent=1 // loop_header
      %s16 = sphi 0, %s20
      %p17 = scmp.ge.s32.totalorder %s16, 8
      %s23 = sphi 0, %s42
      %s24 = sphi 0, %s38
      %s25 = sphi 0, %s34
      %s26 = sphi 0, %s23
      %s27 = sphi 0, %s24
      %s28 = sphi 0, %s25
      %s29 = sphi 0, %s26
      %s30 = sphi 0, %s27
      %s31 = sphi 0, %s28
      %s45 = sphi 0, %s47
      %s48 = sphi 0, %s45
      %s49 = sphi 0, %s48
      %s65 = sphi 0, %s49
      %s73 = sphi 0, %s75
      %s76 = sphi 0, %s73
      %s77 = sphi 0, %s76
      %s93 = sphi 0, %s77
      %s99 = sphi 0, %s101
      %s102 = sphi 0, %s99
      %s103 = sphi 0, %s102
      %s119 = sphi 0, %s103
      %s127 = sphi 0, %s129
      %s130 = sphi 0, %s127
      %s131 = sphi 0, %s130
      %s147 = sphi 0, %s131
    $region4: #{tpu_custom_call.1} parent=1 // loop_header_branch
      %19 = sbr.rel (%p17) target = $region8
    $region5: #{tpu_custom_call.1} parent=1 // loop_body
      %s21 = ssub.s32 %s16, 1
      %s22 = ssub.s32 %s16, 2
      %s32 = sadd.s32 1, %s25
      %p33 = scmp.ge.s32.totalorder %s32, 3
      %s34 = scalar_select %p33, 0, %s32
      %s35 = sadd.s32 1, %s24
      %s36 = scalar_select %p33, %s35, %s24
      %p37 = scmp.ge.s32.totalorder %s36, 2
      %s38 = scalar_select %p37, 0, %s36
      %s39 = sadd.s32 1, %s23
      %s40 = scalar_select %p37, %s39, %s23
      %p41 = scmp.ge.s32.totalorder %s40, 1
      %s42 = scalar_select %p41, 0, %s40
      %s43 = ssub.s32 %s23, %s42
      %p44 = scmp.eq.s32.totalorder %s43, 0
      %s46 = sadd.s32 %s45, 1
      %s47 = scalar_select %p44, %s45, %s46
      %p50 = pneg %p44
      %p51 = scmp.eq.s32.totalorder %s16, 5
      %p52 = por %p50, %p51
      %p53 = scmp.ne.s32.totalorder %s45, %s48
      %p54 = scmp.eq.s32.totalorder %s16, 0
      %p55 = por %p53, %p54
      %p56 = scmp.ne.s32.totalorder %s45, %s48
      %p57 = scmp.eq.s32.totalorder %s21, 5
      %p58 = por %p56, %p57
      %p59 = scmp.ne.s32.totalorder %s48, %s49
      %p60 = scmp.eq.s32.totalorder %s21, 0
      %p61 = por %p59, %p60
      %p62 = scmp.ne.s32.totalorder %s48, %s49
      %p63 = scmp.eq.s32.totalorder %s22, 5
      %p64 = por %p62, %p63
      %p66 = scmp.ne.s32.totalorder %s49, %s65
      %p67 = scmp.eq.s32.totalorder %s22, 0
      %p68 = por %p66, %p67
      %s69 = ssub.s32 %s25, %s34
      %s70 = ssub.s32 %s24, %s38
      %s71 = sor.u32 %s69, %s70
      %p72 = scmp.eq.s32.totalorder %s71, 0
      %s74 = sadd.s32 %s73, 1
      %s75 = scalar_select %p72, %s73, %s74
      %p78 = pneg %p72
      %p79 = scmp.eq.s32.totalorder %s16, 5
      %p80 = por %p78, %p79
      %p81 = scmp.ne.s32.totalorder %s73, %s76
      %p82 = scmp.eq.s32.totalorder %s16, 0
      %p83 = por %p81, %p82
      %p84 = scmp.ne.s32.totalorder %s73, %s76
      %p85 = scmp.eq.s32.totalorder %s21, 5
      %p86 = por %p84, %p85
      %p87 = scmp.ne.s32.totalorder %s76, %s77
      %p88 = scmp.eq.s32.totalorder %s21, 0
      %p89 = por %p87, %p88
      %p90 = scmp.ne.s32.totalorder %s76, %s77
      %p91 = scmp.eq.s32.totalorder %s22, 5
      %p92 = por %p90, %p91
      %p94 = scmp.ne.s32.totalorder %s77, %s93
      %p95 = scmp.eq.s32.totalorder %s22, 0
      %p96 = por %p94, %p95
      %s97 = ssub.s32 %s24, %s38
      %p98 = scmp.eq.s32.totalorder %s97, 0
      %s100 = sadd.s32 %s99, 1
      %s101 = scalar_select %p98, %s99, %s100
      %p104 = pneg %p98
      %p105 = scmp.eq.s32.totalorder %s16, 5
      %p106 = por %p104, %p105
      %p107 = scmp.ne.s32.totalorder %s99, %s102
      %p108 = scmp.eq.s32.totalorder %s16, 0
      %p109 = por %p107, %p108
      %p110 = scmp.ne.s32.totalorder %s99, %s102
      %p111 = scmp.eq.s32.totalorder %s21, 5
      %p112 = por %p110, %p111
      %p113 = scmp.ne.s32.totalorder %s102, %s103
      %p114 = scmp.eq.s32.totalorder %s21, 0
      %p115 = por %p113, %p114
      %p116 = scmp.ne.s32.totalorder %s102, %s103
      %p117 = scmp.eq.s32.totalorder %s22, 5
      %p118 = por %p116, %p117
      %p120 = scmp.ne.s32.totalorder %s103, %s119
      %p121 = scmp.eq.s32.totalorder %s22, 0
      %p122 = por %p120, %p121
      %s123 = ssub.s32 %s23, %s42
      %s124 = ssub.s32 %s24, %s38
      %s125 = sor.u32 %s123, %s124
      %p126 = scmp.eq.s32.totalorder %s125, 0
      %s128 = sadd.s32 %s127, 1
      %s129 = scalar_select %p126, %s127, %s128
      %p132 = pneg %p126
      %p133 = scmp.eq.s32.totalorder %s16, 5
      %p134 = por %p132, %p133
      %p135 = scmp.ne.s32.totalorder %s127, %s130
      %p136 = scmp.eq.s32.totalorder %s16, 0
      %p137 = por %p135, %p136
      %p138 = scmp.ne.s32.totalorder %s127, %s130
      %p139 = scmp.eq.s32.totalorder %s21, 5
      %p140 = por %p138, %p139
      %p141 = scmp.ne.s32.totalorder %s130, %s131
      %p142 = scmp.eq.s32.totalorder %s21, 0
      %p143 = por %p141, %p142
      %p144 = scmp.ne.s32.totalorder %s130, %s131
      %p145 = scmp.eq.s32.totalorder %s22, 5
      %p146 = por %p144, %p145
      %p148 = scmp.ne.s32.totalorder %s131, %s147
      %p149 = scmp.eq.s32.totalorder %s22, 0
      %p150 = por %p148, %p149
      %p151 = scmp.le.s32.totalorder 1, %s16
      %p152 = scmp.lt.s32.totalorder %s16, 7
      %p153 = pnand %p151, %p152
      %p154 = pneg %p153
      // Predicated region
      $region9: #{tpu_custom_call.1} parent=5 // pred_check
        _
      $region10: #{tpu_custom_call.1} parent=5 // pred_check_branch
        %156 = sbr.rel (%p153) target = $region12
      $region11: #{tpu_custom_call.1} parent=5 // pred_region
        %s157 = ssub.s32 %s16, 1
        // Predicated region
        $region13: #{tpu_custom_call.1} parent=11 // pred_check
          %p158 = pneg %p61
        $region14: #{tpu_custom_call.1} parent=11 // pred_check_branch
          %160 = sbr.rel (%p158) target = $region16
        $region15: #{tpu_custom_call.1} parent=11 // pred_region
          %s162 = ssub.s32 128, 128
          %163 = vsyncadd [#allocation3], %s162
          %s164 = smul.addr %s26, 128
          %s165 = scalar_lea.hbm %s0, %s164
          %s167 = sshll.u32 [#allocation2], 4
          %s168 = int_to_ptr.vmem [resolvable:$true] %s167
          %170 = dma.hbm_to_vmem [thread:$0]  %s165, 128, %s168, [#allocation3]
        $region16: #{tpu_custom_call.1} parent=11 // pred_fallthru
          _
      $region12: #{tpu_custom_call.1} parent=5 // pred_fallthru
        _
      %p171 = scmp.lt.s32.totalorder %s16, 6
      // Predicated region
      $region17: #{tpu_custom_call.1} parent=5 // pred_check
        %p172 = pneg %p171
      $region18: #{tpu_custom_call.1} parent=5 // pred_check_branch
        %174 = sbr.rel (%p172) target = $region20
      $region19: #{tpu_custom_call.1} parent=5 // pred_region
        // Predicated region
        $region21: #{tpu_custom_call.1} parent=19 // pred_check
          %p175 = pneg %p83
        $region22: #{tpu_custom_call.1} parent=19 // pred_check_branch
          %177 = sbr.rel (%p175) target = $region24
        $region23: #{tpu_custom_call.1} parent=19 // pred_region
          %s178 = sand.u32 %s73, 1
          %s179 = scalar_lea.sflag [#allocation6], %s178
          %s180 = sand.u32 %s73, 1
          %s181 = smul.addr %s180, 40
          %s182 = scalar_lea.vmem [#allocation5], %s181
          %s183 = smul.u32 5, %s25
          %s185 = ssub.s32 640, 640
          %186 = vsyncadd %s179, %s185
          %s187 = smul.addr %s183, 2
          %s188 = sadd.s32 %s24, %s187
          %s189 = smul.addr %s188, 128
          %s190 = scalar_lea.hbm %s1, %s189
          %s191 = sshll.u32 %s182, 4
          %s192 = int_to_ptr.vmem [resolvable:$true] %s191
          %197 = dma.hbm_to_vmem [thread:$0]  %s190, 640, %s192, %s179, 256, 128, 8
        $region24: #{tpu_custom_call.1} parent=19 // pred_fallthru
          _
        // Predicated region
        $region25: #{tpu_custom_call.1} parent=19 // pred_check
          %p198 = pneg %p109
        $region26: #{tpu_custom_call.1} parent=19 // pred_check_branch
          %200 = sbr.rel (%p198) target = $region28
        $region27: #{tpu_custom_call.1} parent=19 // pred_region
          %p201 = scmp.lt.s32.totalorder %s24, 1
          %s202 = scalar_select %p201, %s24, 1
          %s203 = scalar_lea.vmem %s2, %s202
        $region28: #{tpu_custom_call.1} parent=19 // pred_fallthru
          _
      $region20: #{tpu_custom_call.1} parent=5 // pred_fallthru
        _
      %p204 = scmp.le.s32.totalorder 1, %s16
      %p205 = scmp.lt.s32.totalorder %s16, 7
      %p206 = pnand %p204, %p205
      %p207 = pneg %p206
      // Predicated region
      $region29: #{tpu_custom_call.1} parent=5 // pred_check
        _
      $region30: #{tpu_custom_call.1} parent=5 // pred_check_branch
        %209 = sbr.rel (%p206) target = $region32
      $region31: #{tpu_custom_call.1} parent=5 // pred_region
        %s210 = ssub.s32 %s16, 1
        // Predicated region
        $region33: #{tpu_custom_call.1} parent=31 // pred_check
          %p211 = pneg %p61
        $region34: #{tpu_custom_call.1} parent=31 // pred_check_branch
          %213 = sbr.rel (%p211) target = $region36
        $region35: #{tpu_custom_call.1} parent=31 // pred_region
          %214 = dma.done [#allocation3], 128
        $region36: #{tpu_custom_call.1} parent=31 // pred_fallthru
          _
        %s215 = sand.u32 %s76, 1
        %s216 = scalar_lea.sflag [#allocation6], %s215
        %s217 = sand.u32 %s76, 1
        %s218 = smul.addr %s217, 40
        %s219 = scalar_lea.vmem [#allocation5], %s218
        // Predicated region
        $region37: #{tpu_custom_call.1} parent=31 // pred_check
          %p220 = pneg %p89
        $region38: #{tpu_custom_call.1} parent=31 // pred_check_branch
          %222 = sbr.rel (%p220) target = $region40
        $region39: #{tpu_custom_call.1} parent=31 // pred_region
          %223 = dma.done %s216, 640
        $region40: #{tpu_custom_call.1} parent=31 // pred_fallthru
          _
        %p224 = pneg %p61
        %p225 = pneg %p58
        %s226 = sand.u32 %s76, 1
        %s227 = scalar_lea.sflag [#allocation6], %s226
        %s228 = sand.u32 %s76, 1
        %s229 = smul.addr %s228, 40
        %s230 = scalar_lea.vmem [#allocation5], %s229
        %p231 = pneg %p89
        %p232 = pneg %p86
        %p233 = scmp.lt.s32.totalorder %s27, 1
        %s234 = scalar_select %p233, %s27, 1
        %s235 = scalar_lea.vmem %s2, %s234
        %p236 = pneg %p115
        %p237 = pneg %p112
        %p238 = pneg %p143
        %p239 = pneg %p140
        %s240 = sand.u32 %s130, 1
        %s241 = scalar_lea.sflag [#allocation4], %s240
        %s242 = sand.u32 %s130, 1
        %s243 = smul.addr %s242, 8
        %s244 = scalar_lea.vmem [#allocation7], %s243
        %s245 = smul.u32 5, %s28
        %p246 = scmp.lt.s32.totalorder %s27, 1
        %s247 = scalar_select %p246, %s27, 1
        %s248 = scalar_lea.vmem %s2, %s247
        %p249 = scmp.eq.s32.totalorder %s28, 0
        // Predicated region
        $region41: #{tpu_custom_call.1} parent=31 // pred_check
          %p250 = pneg %p249
        $region42: #{tpu_custom_call.1} parent=31 // pred_check_branch
          %252 = sbr.rel (%p250) target = $region44
        $region43: #{tpu_custom_call.1} parent=31 // pred_region
          %v253 = vld [vmem:[%s248] sm:$0x1]
          %v255 = vlaneseq
          %v256 = vshrl.u32 %v255, 7
          %v257 = vsub.s32 0, %v256
          %v258 = vrot.slane %v253, %v257
          %260 = vst [vmem:[%s244] sm:$0xff] %v258
        $region44: #{tpu_custom_call.1} parent=31 // pred_fallthru
          _
        %v261 = vld [vmem:[%s244] sm:$0xff]
        %v262 = vld [vmem:[#allocation2] sm:$0xff]
        %v263 = vld [vmem:[%s219] sm:$0xff]
        %v264 = vld [vmem:[%s219 + $0x8] sm:$0xff]
        %v265 = vld [vmem:[%s219 + $0x10] sm:$0xff]
        %v266 = vld [vmem:[%s219 + $0x18] sm:$0xff]
        %v267 = vld [vmem:[%s219 + $0x20] sm:$0xff]
        %vm268 = vcmask 326656
        %v270 = vsel %vm268, %v262, 0
        %272 = vmatprep.subr.mxu0 0.0
        %273 = vmatpush1.msra.mxu0 %v263
        %274 = vmatprep.subr.mxu0 0.0
        %275 = vmatpush1.msra.mxu0 %v264
        %276 = vmatprep.subr.mxu0 0.0
        %277 = vmatpush1.msra.mxu0 %v265
        %278 = vmatprep.subr.mxu0 0.0
        %279 = vmatpush1.msra.mxu0 %v266
        %280 = vmatprep.subr.mxu0 0.0
        %281 = vmatpush1.msra.mxu0 %v267
        %282 = vmatprep.subr.mxu0 0.0
        %283 = vmatpush1.msra.mxu0 0.0
        %284 = vmatprep.subr.mxu0 0.0
        %285 = vmatpush1.msra.mxu0 0.0
        %286 = vmatprep.subr.mxu0 0.0
        %287 = vmatpush1.msra.mxu0 0.0
        %288 = vmatprep.subr.mxu0 0.0
        %289 = vmatpush1.msra.mxu0 0.0
        %290 = vmatprep.subr.mxu0 0.0
        %291 = vmatpush1.msra.mxu0 0.0
        %292 = vmatprep.subr.mxu0 0.0
        %293 = vmatpush1.msra.mxu0 0.0
        %294 = vmatprep.subr.mxu0 0.0
        %295 = vmatpush1.msra.mxu0 0.0
        %296 = vmatprep.subr.mxu0 0.0
        %297 = vmatpush1.msra.mxu0 0.0
        %298 = vmatprep.subr.mxu0 0.0
        %299 = vmatpush1.msra.mxu0 0.0
        %300 = vmatprep.subr.mxu0 0.0
        %301 = vmatpush1.msra.mxu0 0.0
        %302 = vmatprep.subr.mxu0 0.0
        %303 = vmatpush1.msra.mxu0 0.0
        %304 = vmatprep.subr.mxu0 0.0
        %305 = vmatpush1.msra.mxu0 0.0
        %306 = vmatprep.subr.mxu0 0.0
        %307 = vmatpush1.msra.mxu0 0.0
        %308 = vmatprep.subr.mxu0 0.0
        %309 = vmatpush1.msra.mxu0 0.0
        %310 = vmatprep.subr.mxu0 0.0
        %311 = vmatpush1.msra.mxu0 0.0
        %312 = vmatprep.subr.mxu0 0.0
        %313 = vmatpush1.msra.mxu0 0.0
        %314 = vmatprep.subr.mxu0 0.0
        %315 = vmatpush1.msra.mxu0 0.0
        %316 = vmatprep.subr.mxu0 0.0
        %317 = vmatpush1.msra.mxu0 0.0
        %318 = vmatprep.subr.mxu0 0.0
        %319 = vmatpush1.msra.mxu0 0.0
        %320 = vmatprep.subr.mxu0 0.0
        %321 = vmatpush1.msra.mxu0 0.0
        %322 = vmatprep.subr.mxu0 0.0
        %323 = vmatpush1.msra.mxu0 0.0
        %324 = vmatprep.subr.mxu0 0.0
        %325 = vmatpush1.msra.mxu0 0.0
        %326 = vmatprep.subr.mxu0 0.0
        %327 = vmatpush1.msra.mxu0 0.0
        %328 = vmatprep.subr.mxu0 0.0
        %329 = vmatpush1.msra.mxu0 0.0
        %330 = vmatprep.subr.mxu0 0.0
        %331 = vmatpush1.msra.mxu0 0.0
        %332 = vmatprep.subr.mxu0 0.0
        %333 = vmatpush1.msra.mxu0 0.0
        %334 = vmatprep.subr.mxu0 0.0
        %335 = vmatpush1.msra.mxu0 0.0
        %336 = vmatprep.mubr.f32.mxu0 0.0
        %337 = vmatmul.mubr.f32.gmra.mrb[0].mxu0 %v270
        %v338 = vpop.f32.mrb[0].mxu0
        %v339 = vadd.f32 0.0, %v338
        %v340 = vpop.f32.mrb[0].mxu0
        %341 = vdwg.mxu0
        %v342 = vadd.f32 %v261, %v339
        %343 = vst [vmem:[%s244] sm:$0xff] %v342
        %s344 = sand.u32 %s130, 1
        %s345 = scalar_lea.sflag [#allocation4], %s344
        %s346 = sand.u32 %s130, 1
        %s347 = smul.addr %s346, 8
        %s348 = scalar_lea.vmem [#allocation7], %s347
        // Predicated region
        $region45: #{tpu_custom_call.1} parent=31 // pred_check
          %p349 = pneg %p140
        $region46: #{tpu_custom_call.1} parent=31 // pred_check_branch
          %351 = sbr.rel (%p349) target = $region48
        $region47: #{tpu_custom_call.1} parent=31 // pred_region
          %s353 = ssub.s32 128, 128
          %354 = vsyncadd %s345, %s353
          %s355 = smul.addr %s26, 2
          %s356 = sadd.s32 %s27, %s355
          %s357 = smul.addr %s356, 128
          %s358 = scalar_lea.hbm %s3, %s357
          %s360 = sshll.u32 %s348, 4
          %s361 = int_to_ptr.vmem [resolvable:$true] %s360
          %363 = dma.vmem_to_hbm [thread:$0]  %s361, 128, %s358, %s345
        $region48: #{tpu_custom_call.1} parent=31 // pred_fallthru
          _
      $region32: #{tpu_custom_call.1} parent=5 // pred_fallthru
        _
      %p364 = scmp.le.s32.totalorder 2, %s16
      // Predicated region
      $region49: #{tpu_custom_call.1} parent=5 // pred_check
        %p365 = pneg %p364
      $region50: #{tpu_custom_call.1} parent=5 // pred_check_branch
        %367 = sbr.rel (%p365) target = $region52
      $region51: #{tpu_custom_call.1} parent=5 // pred_region
        %s368 = ssub.s32 %s16, 2
        // Predicated region
        $region53: #{tpu_custom_call.1} parent=51 // pred_check
          %p369 = pneg %p146
        $region54: #{tpu_custom_call.1} parent=51 // pred_check_branch
          %371 = sbr.rel (%p369) target = $region56
        $region55: #{tpu_custom_call.1} parent=51 // pred_region
          %s372 = sand.u32 %s131, 1
          %s373 = scalar_lea.sflag [#allocation4], %s372
          %s374 = sand.u32 %s131, 1
          %s375 = smul.addr %s374, 8
          %s376 = scalar_lea.vmem [#allocation7], %s375
          %377 = dma.done %s373, 128
        $region56: #{tpu_custom_call.1} parent=51 // pred_fallthru
          _
      $region52: #{tpu_custom_call.1} parent=5 // pred_fallthru
        _
    $region6: #{tpu_custom_call.1} parent=1 // loop_footer
      %s20 = sadd.s32 1, %s16
    $region7: #{tpu_custom_call.1} parent=1 // loop_footer_branch
      %15 = sbr.rel target = $region3
    $region8: #{tpu_custom_call.1} parent=1 // loop_exit
      _
    %378 = vsyncpa [#allocation3], 1
    %s379 = scalar_lea.sflag [#allocation3], 1
    %380 = vsyncpa %s379, 1
    %381 = vsyncpa [#allocation6], 1
    %s382 = scalar_lea.sflag [#allocation6], 1
    %383 = vsyncpa %s382, 1
    %384 = vsyncpa [#allocation4], 1
    %s385 = scalar_lea.sflag [#allocation4], 1
    %386 = vsyncpa %s385, 1

</llo_original>
